<compile_context>
chip_gen: v5e
topology: v5e:2x2
jax: 0.10.0
libtpu: 0.0.40
codegen_flags: <defaults>
</compile_context>

<pallas_src>
import jax
import jax.numpy as jnp
from jax.experimental import pallas as pl
from jax.experimental.pallas import tpu as pltpu

_LANE = 128                       # vreg lane width
_COL_CANDIDATES = (1024, 512, 384, 256, 128)   # lane-dense slab widths
_TARGET_BLOCK_BYTES = 8 * 1024 * 1024          # ~8 MiB per input block


def _sublane_depth(dtype) -> int:
    """Native sublane tile depth for this dtype (8 f32, 16 bf16, 32 int8/fp8)."""
    itemsize = jnp.dtype(dtype).itemsize
    return max(8, 32 // itemsize)


def _vmem_limit_bytes() -> int:
    """Per-generation scoped-VMEM budget (conservative if info unavailable)."""
    try:
        cap = pltpu.get_tpu_info().vmem_capacity_bytes
    except Exception:
        cap = 64 * 1024 * 1024
    if cap <= 64 * 1024 * 1024:          # v7x-class: 64 MiB physical per TC
        return 48 * 1024 * 1024
    return 64 * 1024 * 1024              # v5e / v6e: 128 MiB physical


def _choose_cols(total: int):
    """Largest lane-dense width (multiple of 128) that divides `total`."""
    for c in _COL_CANDIDATES:
        if total % c == 0:
            return c
    return None


def _cost_estimate(total: int, in_dtype, out_dtype):
    try:
        return pl.CostEstimate(
            flops=2 * total,
            transcendentals=total,      # heuristic for SiLU-like funcs
            bytes_accessed=total * (jnp.dtype(in_dtype).itemsize
                                    + jnp.dtype(out_dtype).itemsize),
        )
    except Exception:
        return None


def _make_lambda_kernel(func):
    """Pallas kernel body applying `func` elementwise to one tile."""

    def kernel(x_ref, o_ref):
        o_ref[...] = func(x_ref[...])

    return kernel


def pallas_lambda(func):
    """Pallas analogue of `Lambda(func)` for ELEMENTWISE, shape-preserving funcs.

    Returns `apply(x)` that runs `func` on-TPU inside a tiled Pallas kernel.
    """
    # TODO(synk): PyTorch `Lambda` accepts arbitrary funcs (reshapes, axis
    # reductions, slicing, ...); this kernel path only supports elementwise,
    # shape-preserving funcs — non-elementwise funcs would be applied per
    # block of the flattened slab and give wrong results.

    kernel = _make_lambda_kernel(func)

    def _apply(x):
        orig_shape = x.shape
        total = x.size

        # Output dtype via abstract evaluation (func must preserve shape).
        out_aval = jax.eval_shape(func, jax.ShapeDtypeStruct(x.shape, x.dtype))
        assert out_aval.shape == x.shape, "pallas_lambda requires shape-preserving func"
        out_dtype = out_aval.dtype

        # ---- lane-dense 2D slab (no padding in the common case) ----------
        cols = _choose_cols(total)
        padded = False
        if cols is None:
            # Rare fallback: total not divisible by 128 -> pad one slab row.
            cols = 512
            rows = pl.cdiv(total, cols)
            pad = rows * cols - total
            flat = jnp.pad(x.reshape(-1), (0, pad))
            x2 = flat.reshape(rows, cols)
            padded = True
        else:
            rows = total // cols
            x2 = x.reshape(rows, cols)        # pure reshape, no HBM copy

        # ---- block geometry ----------------------------------------------
        itemsize = jnp.dtype(x.dtype).itemsize
        sub = _sublane_depth(x.dtype)

        if rows <= sub:
            br = rows                          # single block == full array dims
        else:
            target_rows = max(sub, (_TARGET_BLOCK_BYTES // (cols * itemsize)) // sub * sub)
            br = min(target_rows, (rows // sub) * sub)
            if rows > 2 * sub:
                # Keep >= 2 blocks so both v7x TensorCores get work.
                half = (-(-rows // 2) + sub - 1) // sub * sub
                br = min(br, half)
            br = max(br, sub)

        grid = (pl.cdiv(rows, br),)            # ragged last block is masked

        out2 = pl.pallas_call(
            kernel,
            out_shape=jax.ShapeDtypeStruct((rows, cols), out_dtype),
            grid=grid,
            in_specs=[pl.BlockSpec((br, cols), lambda i: (i, 0))],
            out_specs=pl.BlockSpec((br, cols), lambda i: (i, 0)),
            compiler_params=pltpu.CompilerParams(
                dimension_semantics=("parallel",),
                vmem_limit_bytes=_vmem_limit_bytes(),
            ),
            cost_estimate=_cost_estimate(total, x.dtype, out_dtype),
        )(x2)

        if padded:
            # Slice padding off BEFORE reshaping back (func(pad) may be nonzero).
            return out2.reshape(-1)[:total].reshape(orig_shape)
        return out2.reshape(orig_shape)

    return jax.jit(_apply)


if __name__ == "__main__":
    # Demo func: SiLU, x * sigmoid(x), written with the single-EUP tanh form
    # of sigmoid (sigmoid(x) == 0.5*tanh(0.5*x) + 0.5).
    func = lambda v: v * (0.5 * jnp.tanh(0.5 * v) + 0.5)

    key = jax.random.PRNGKey(0)
    x = jax.random.normal(key, (2, 4, 16, 16), dtype=jnp.float32)  # NCHW

    lambda_layer = pallas_lambda(func)
    out = lambda_layer(x)
    out = jax.block_until_ready(out)

    # Reference check (plain JAX, same func => exact Lambda semantics).
    ref = func(x)
    assert out.shape == x.shape
    assert out.dtype == x.dtype
    assert jnp.allclose(out, ref, atol=1e-6, rtol=1e-6)
    # Sanity: matches canonical SiLU too.
    assert jnp.allclose(out, x * jax.nn.sigmoid(x), atol=1e-5, rtol=1e-5)

    print("KERNEL_OK")
</pallas_src>

<mosaic_0001>
module attributes {stable_mosaic.version = 11 : i64} {
  func.func @kernel(%arg0: i32, %arg1: memref<2x1024xf32, #tpu.memory_space<vmem>>, %arg2: memref<2x1024xf32, #tpu.memory_space<vmem>>) attributes {dimension_semantics = [#tpu.dimension_semantics<parallel>], iteration_bounds = array<i64: 1>, scalar_prefetch = 0 : i64, scratch_operands = 0 : i64, tpu.core_type = #tpu.core_type<tc>, window_params = [{transform_indices = @transform_0, window_bounds = array<i64: 2, 1024>}, {transform_indices = @transform_1, window_bounds = array<i64: 2, 1024>}]} {
    %c0 = arith.constant 0 : index
    %c0_0 = arith.constant 0 : index
    %0 = vector.load %arg1[%c0, %c0_0] : memref<2x1024xf32, #tpu.memory_space<vmem>>, vector<2x1024xf32>
    %cst = arith.constant 5.000000e-01 : f32
    %1 = vector.broadcast %cst : f32 to vector<2x1024xf32>
    %2 = arith.mulf %1, %0 : vector<2x1024xf32>
    %3 = math.tanh %2 : vector<2x1024xf32>
    %cst_1 = arith.constant 5.000000e-01 : f32
    %4 = vector.broadcast %cst_1 : f32 to vector<2x1024xf32>
    %5 = arith.mulf %4, %3 : vector<2x1024xf32>
    %cst_2 = arith.constant 5.000000e-01 : f32
    %6 = vector.broadcast %cst_2 : f32 to vector<2x1024xf32>
    %7 = arith.addf %5, %6 : vector<2x1024xf32>
    %8 = arith.mulf %0, %7 : vector<2x1024xf32>
    %c0_3 = arith.constant 0 : index
    %c0_4 = arith.constant 0 : index
    %9 = vector.load %arg2[%c0_3, %c0_4] : memref<2x1024xf32, #tpu.memory_space<vmem>>, vector<2x1024xf32>
    tpu.vector_store %arg2[%c0_3, %c0_4], %8 {strides = array<i32>} : memref<2x1024xf32, #tpu.memory_space<vmem>>, vector<2x1024xf32>,
    return
  }
  func.func @transform_0(%arg0: i32) -> (i32, i32) {
    %c0_i32 = arith.constant 0 : i32
    %c0_i32_0 = arith.constant 0 : i32
    return %arg0, %c0_i32 : i32, i32
  }
  func.func @transform_1(%arg0: i32) -> (i32, i32) {
    %c0_i32 = arith.constant 0 : i32
    %c0_i32_0 = arith.constant 0 : i32
    return %arg0, %c0_i32 : i32, i32
  }
}

</mosaic_0001>

<llo_original>
// kernel: _apply.1
$region0: #{_apply.1}
  #allocation0 [shape = 'u32[]', space=smem, size = 0x4, offset = 0x4, fixed_abs, tag = 'smem constant byte address 0x4 - core index']
  #allocation1 [shape = 'u32[72,128]{1,0:T(1,128)}', space=vmem, size = 0x9000, scoped, tag = 'internal scratch']
  %s0 = inlined_call_operand.vmem [shape: f32[2,1024], index: 0, kind: input, shape index: {}]
  %s1 = inlined_call_operand.vmem [shape: f32[2,1024], index: 1, kind: output, shape index: {}]
  %s2 = sld [smem:[#allocation0]]
  $region14: #{_apply.1} parent=0
    _
  %s4 = ssub.s32 1, %s2
  %s5 = scalar_select 0, %s4, %s2
  // Predicated region
  $region2: #{_apply.1} parent=0 // pred_check
    _
  $region3: #{_apply.1} parent=0 // pred_check_branch
    %7 = sbr.rel (0) target = $region5
  $region4: #{_apply.1} parent=0 // pred_region
    _
  $region5: #{_apply.1} parent=0 // pred_fallthru
    _
  %v8 = vld [vmem:[%s0] sm:$0xff]
  %v9 = vld [vmem:[%s0 + $0x8] sm:$0xff]
  %v10 = vmul.f32 %v8, 0.5
  %v11 = vmul.f32 %v9, 0.5
  %v12 = vtanh.pop %v10
  %v13 = vtanh.pop %v11
  %v14 = vmul.f32 %v12, 0.5
  %v15 = vmul.f32 %v13, 0.5
  %v16 = vadd.f32 %v14, 0.5
  %v17 = vadd.f32 %v15, 0.5
  %v18 = vmul.f32 %v8, %v16
  %v19 = vmul.f32 %v9, %v17
  %20 = vst [vmem:[%s1] sm:$0xff] %v18
  %21 = vst [vmem:[%s1 + $0x8] sm:$0xff] %v19
  // Predicated region
  $region6: #{_apply.1} parent=0 // pred_check
    _
  $region7: #{_apply.1} parent=0 // pred_check_branch
    %23 = sbr.rel (0) target = $region9
  $region8: #{_apply.1} parent=0 // pred_region
    _
  $region9: #{_apply.1} parent=0 // pred_fallthru
    _
  // Predicated region
  $region10: #{_apply.1} parent=0 // pred_check
    _
  $region11: #{_apply.1} parent=0 // pred_check_branch
    %25 = sbr.rel (0) target = $region13
  $region12: #{_apply.1} parent=0 // pred_region
    _
  $region13: #{_apply.1} parent=0 // pred_fallthru
    _

</llo_original>
